<compile_context>
chip_gen: v5e
topology: v5e:2x2
jax: 0.10.0
libtpu: 0.0.40
codegen_flags: <defaults>
</compile_context>

<pallas_src>
import math

import jax
import jax.numpy as jnp
from jax.experimental import pallas as pl
from jax.experimental.pallas import tpu as pltpu

STATE_SIZE = 33
H1, H2, H3 = 128, 64, 32
ACTION_SIZE = 4
INIT_STD = 1.0
_LOG_2PI = math.log(2.0 * math.pi)
_TILE_B_MAX = 512  # batch rows per grid step (multiple of 8); sweepable.


def _make_kernel(mode):
    """Build a kernel specialized at trace time.

    mode == "sample": actions = means + std * noise      (training, actions=None)
    mode == "mean"  : actions = means                    (eval, actions=None)
    mode == "given" : actions supplied by the caller     (log_prob path)
    """

    def kernel(*refs):
        state_ref = refs[0]
        idx = 1
        if mode == "sample":
            noise_ref = refs[idx]
            idx += 1
        elif mode == "given":
            act_ref = refs[idx]
            idx += 1
        (w1_ref, b1_ref, w2_ref, b2_ref, w3_ref, b3_ref,
         w4_ref, small_ref, out_ref) = refs[idx:]

        x = state_ref[...]
        h = jnp.maximum(
            jnp.dot(x, w1_ref[...], preferred_element_type=jnp.float32) + b1_ref[...], 0.0)
        h = jnp.maximum(
            jnp.dot(h, w2_ref[...], preferred_element_type=jnp.float32) + b2_ref[...], 0.0)
        h = jnp.maximum(
            jnp.dot(h, w3_ref[...], preferred_element_type=jnp.float32) + b3_ref[...], 0.0)

        # Packed small constants: rows = [b4, std, -0.5/var, log(std)+0.5*log(2*pi)]
        b4 = small_ref[0:1, :]
        std = small_ref[1:2, :]
        neg_half_inv_var = small_ref[2:3, :]
        log_norm = small_ref[3:4, :]

        means = jnp.tanh(
            jnp.dot(h, w4_ref[...], preferred_element_type=jnp.float32) + b4)

        if mode == "sample":
            actions = means + std * noise_ref[...]
        elif mode == "mean":
            actions = means
        else:  # "given"
            actions = act_ref[...]

        diff = actions - means
        logp = diff * diff * neg_half_inv_var - log_norm

        # Pack actions (lanes 0:4) and log_probs (lanes 4:8) into one output stream.
        out_ref[...] = jnp.concatenate([actions, logp], axis=-1)

    return kernel


def init_params(key):
    """Deterministic parameter init matching nn.Linear default (U[-1/sqrt(fan_in), +])."""
    params = {}
    sizes = [(STATE_SIZE, H1), (H1, H2), (H2, H3), (H3, ACTION_SIZE)]
    keys = jax.random.split(key, 2 * len(sizes))
    for i, (fan_in, fan_out) in enumerate(sizes):
        bound = 1.0 / math.sqrt(fan_in)
        params[f"w{i + 1}"] = jax.random.uniform(
            keys[2 * i], (fan_in, fan_out), jnp.float32, -bound, bound)
        params[f"b{i + 1}"] = jax.random.uniform(
            keys[2 * i + 1], (1, fan_out), jnp.float32, -bound, bound)
    params["std"] = INIT_STD * jnp.ones((1, ACTION_SIZE), jnp.float32)
    return params


def reacher_policy_forward(params, state, actions=None, training_mode=True,
                           key=None, tile_b=None):
    """Returns (actions, log_probs), mirroring ReacherPolicy.forward."""
    state = state.astype(jnp.float32)
    B = state.shape[0]

    if tile_b is None:
        tile_b = B if B <= _TILE_B_MAX else _TILE_B_MAX
    grid = (pl.cdiv(B, tile_b),)

    # Precompute per-action constants once (wrapper-side, tiny XLA ops).
    std = params["std"]
    neg_half_inv_var = -0.5 / (std * std)
    log_norm = jnp.log(std) + 0.5 * _LOG_2PI
    small = jnp.concatenate([params["b4"], std, neg_half_inv_var, log_norm],
                            axis=0)  # (4, ACTION_SIZE)

    weight_inputs = (params["w1"], params["b1"], params["w2"], params["b2"],
                     params["w3"], params["b3"], params["w4"], small)
    weight_specs = [
        pl.BlockSpec((STATE_SIZE, H1), lambda i: (0, 0)),
        pl.BlockSpec((1, H1), lambda i: (0, 0)),
        pl.BlockSpec((H1, H2), lambda i: (0, 0)),
        pl.BlockSpec((1, H2), lambda i: (0, 0)),
        pl.BlockSpec((H2, H3), lambda i: (0, 0)),
        pl.BlockSpec((1, H3), lambda i: (0, 0)),
        pl.BlockSpec((H3, ACTION_SIZE), lambda i: (0, 0)),
        pl.BlockSpec((4, ACTION_SIZE), lambda i: (0, 0)),
    ]

    def batch_spec(feat):
        return pl.BlockSpec((tile_b, feat), lambda i: (i, 0))

    if actions is None:
        if training_mode:
            assert key is not None, "training_mode sampling needs a PRNG key"
            noise = jax.random.normal(key, (B, ACTION_SIZE), jnp.float32)
            mode = "sample"
            extra_inputs = (noise,)
            extra_specs = [batch_spec(ACTION_SIZE)]
        else:
            mode = "mean"
            extra_inputs = ()
            extra_specs = []
    else:
        mode = "given"
        extra_inputs = (actions.astype(jnp.float32),)
        extra_specs = [batch_spec(ACTION_SIZE)]

    mac = STATE_SIZE * H1 + H1 * H2 + H2 * H3 + H3 * ACTION_SIZE
    weight_elems = mac + H1 + H2 + H3 + 4 * ACTION_SIZE
    row_elems = STATE_SIZE + 2 * ACTION_SIZE + (ACTION_SIZE if extra_inputs else 0)
    cost = pl.CostEstimate(
        flops=2 * B * mac,
        transcendentals=B * ACTION_SIZE,
        bytes_accessed=4 * (B * row_elems + weight_elems),
    )

    packed = pl.pallas_call(
        _make_kernel(mode),
        out_shape=jax.ShapeDtypeStruct((B, 2 * ACTION_SIZE), jnp.float32),
        grid=grid,
        in_specs=[batch_spec(STATE_SIZE)] + extra_specs + weight_specs,
        out_specs=batch_spec(2 * ACTION_SIZE),
        compiler_params=pltpu.CompilerParams(dimension_semantics=("parallel",)),
        cost_estimate=cost,
    )(state, *extra_inputs, *weight_inputs)

    return packed[:, :ACTION_SIZE], packed[:, ACTION_SIZE:]


def _reference_forward(params, state, actions=None, training_mode=True, noise=None):
    """Plain-JAX reference for sanity checking."""
    x = jnp.maximum(state @ params["w1"] + params["b1"], 0.0)
    x = jnp.maximum(x @ params["w2"] + params["b2"], 0.0)
    x = jnp.maximum(x @ params["w3"] + params["b3"], 0.0)
    means = jnp.tanh(x @ params["w4"] + params["b4"])
    std = params["std"]
    if actions is None:
        actions = means + std * noise if (training_mode and noise is not None) else means
    logp = (-((actions - means) ** 2) / (2.0 * std * std)
            - jnp.log(std) - 0.5 * _LOG_2PI)
    return actions, logp


if __name__ == "__main__":
    root = jax.random.PRNGKey(0)
    k_params, k_state, k_sample, k_state2, k_sample2 = jax.random.split(root, 5)

    params = init_params(k_params)

    # Case 1: training mode, sample actions (B=8, single tile).
    B = 8
    state = jax.random.normal(k_state, (B, STATE_SIZE), jnp.float32)
    actions, log_probs = reacher_policy_forward(
        params, state, actions=None, training_mode=True, key=k_sample)
    jax.block_until_ready((actions, log_probs))

    noise = jax.random.normal(k_sample, (B, ACTION_SIZE), jnp.float32)
    ref_a, ref_lp = _reference_forward(params, state, noise=noise)
    assert jnp.allclose(actions, ref_a, atol=1e-5, rtol=1e-5)
    assert jnp.allclose(log_probs, ref_lp, atol=1e-5, rtol=1e-5)

    # Case 2: eval mode, actions == means (no noise stream at all).
    a2, lp2 = reacher_policy_forward(params, state, actions=None, training_mode=False)
    jax.block_until_ready((a2, lp2))
    ra2, rlp2 = _reference_forward(params, state, training_mode=False)
    assert jnp.allclose(a2, ra2, atol=1e-5, rtol=1e-5)
    assert jnp.allclose(lp2, rlp2, atol=1e-5, rtol=1e-5)

    # Case 3: externally supplied actions (log_prob path).
    ext_actions = 0.1 * jnp.ones((B, ACTION_SIZE), jnp.float32)
    a3, lp3 = reacher_policy_forward(params, state, actions=ext_actions)
    jax.block_until_ready((a3, lp3))
    ra3, rlp3 = _reference_forward(params, state, actions=ext_actions)
    assert jnp.allclose(a3, ra3, atol=1e-5, rtol=1e-5)
    assert jnp.allclose(lp3, rlp3, atol=1e-5, rtol=1e-5)

    # Case 4: multi-tile batch grid (B=24, tile_b=8) exercising the pipelined path.
    B2 = 24
    state2 = jax.random.normal(k_state2, (B2, STATE_SIZE), jnp.float32)
    a4, lp4 = reacher_policy_forward(
        params, state2, actions=None, training_mode=True, key=k_sample2, tile_b=8)
    jax.block_until_ready((a4, lp4))
    noise2 = jax.random.normal(k_sample2, (B2, ACTION_SIZE), jnp.float32)
    ra4, rlp4 = _reference_forward(params, state2, noise=noise2)
    assert jnp.allclose(a4, ra4, atol=1e-5, rtol=1e-5)
    assert jnp.allclose(lp4, rlp4, atol=1e-5, rtol=1e-5)

    print("KERNEL_OK")
</pallas_src>

<mosaic_0001>
module attributes {stable_mosaic.version = 11 : i64} {
  func.func @kernel(%arg0: i32, %arg1: memref<8x33xf32, #tpu.memory_space<vmem>>, %arg2: memref<8x4xf32, #tpu.memory_space<vmem>>, %arg3: memref<33x128xf32, #tpu.memory_space<vmem>>, %arg4: memref<1x128xf32, #tpu.memory_space<vmem>>, %arg5: memref<128x64xf32, #tpu.memory_space<vmem>>, %arg6: memref<1x64xf32, #tpu.memory_space<vmem>>, %arg7: memref<64x32xf32, #tpu.memory_space<vmem>>, %arg8: memref<1x32xf32, #tpu.memory_space<vmem>>, %arg9: memref<32x4xf32, #tpu.memory_space<vmem>>, %arg10: memref<4x4xf32, #tpu.memory_space<vmem>>, %arg11: memref<8x8xf32, #tpu.memory_space<vmem>>) attributes {dimension_semantics = [#tpu.dimension_semantics<parallel>], iteration_bounds = array<i64: 1>, scalar_prefetch = 0 : i64, scratch_operands = 0 : i64, tpu.core_type = #tpu.core_type<tc>, window_params = [{transform_indices = @transform_0, window_bounds = array<i64: 8, 33>}, {transform_indices = @transform_1, window_bounds = array<i64: 8, 4>}, {pipeline_mode = #tpu.pipeline_mode<synchronous>, transform_indices = @transform_2, window_bounds = array<i64: 33, 128>}, {pipeline_mode = #tpu.pipeline_mode<synchronous>, transform_indices = @transform_3, window_bounds = array<i64: 1, 128>}, {pipeline_mode = #tpu.pipeline_mode<synchronous>, transform_indices = @transform_4, window_bounds = array<i64: 128, 64>}, {pipeline_mode = #tpu.pipeline_mode<synchronous>, transform_indices = @transform_5, window_bounds = array<i64: 1, 64>}, {pipeline_mode = #tpu.pipeline_mode<synchronous>, transform_indices = @transform_6, window_bounds = array<i64: 64, 32>}, {pipeline_mode = #tpu.pipeline_mode<synchronous>, transform_indices = @transform_7, window_bounds = array<i64: 1, 32>}, {pipeline_mode = #tpu.pipeline_mode<synchronous>, transform_indices = @transform_8, window_bounds = array<i64: 32, 4>}, {pipeline_mode = #tpu.pipeline_mode<synchronous>, transform_indices = @transform_9, window_bounds = array<i64: 4, 4>}, {transform_indices = @transform_10, window_bounds = array<i64: 8, 8>}]} {
    %c0 = arith.constant 0 : index
    %c0_0 = arith.constant 0 : index
    %0 = vector.load %arg1[%c0, %c0_0] : memref<8x33xf32, #tpu.memory_space<vmem>>, vector<8x33xf32>
    %c0_1 = arith.constant 0 : index
    %c0_2 = arith.constant 0 : index
    %1 = vector.load %arg3[%c0_1, %c0_2] : memref<33x128xf32, #tpu.memory_space<vmem>>, vector<33x128xf32>
    %cst = arith.constant dense<0.000000e+00> : vector<8x128xf32>
    %2 = tpu.matmul %0, %1, %cst {dimension_numbers = #tpu.dot_dimension_numbers<[1], [0], [0], [1], [0, 0, 1, 1], [], []>} : vector<8x33xf32>, vector<33x128xf32>, vector<8x128xf32> -> vector<8x128xf32>
    %c0_3 = arith.constant 0 : index
    %c0_4 = arith.constant 0 : index
    %3 = vector.load %arg4[%c0_3, %c0_4] : memref<1x128xf32, #tpu.memory_space<vmem>>, vector<1x128xf32>
    %4 = vector.broadcast %3 : vector<1x128xf32> to vector<8x128xf32>
    %5 = arith.addf %2, %4 : vector<8x128xf32>
    %cst_5 = arith.constant 0.000000e+00 : f32
    %6 = vector.broadcast %cst_5 : f32 to vector<8x128xf32>
    %7 = arith.maximumf %5, %6 : vector<8x128xf32>
    %c0_6 = arith.constant 0 : index
    %c0_7 = arith.constant 0 : index
    %8 = vector.load %arg5[%c0_6, %c0_7] : memref<128x64xf32, #tpu.memory_space<vmem>>, vector<128x64xf32>
    %cst_8 = arith.constant dense<0.000000e+00> : vector<8x64xf32>
    %9 = tpu.matmul %7, %8, %cst_8 {dimension_numbers = #tpu.dot_dimension_numbers<[1], [0], [0], [1], [0, 0, 1, 1], [], []>} : vector<8x128xf32>, vector<128x64xf32>, vector<8x64xf32> -> vector<8x64xf32>
    %c0_9 = arith.constant 0 : index
    %c0_10 = arith.constant 0 : index
    %10 = vector.load %arg6[%c0_9, %c0_10] : memref<1x64xf32, #tpu.memory_space<vmem>>, vector<1x64xf32>
    %11 = vector.broadcast %10 : vector<1x64xf32> to vector<8x64xf32>
    %12 = arith.addf %9, %11 : vector<8x64xf32>
    %cst_11 = arith.constant 0.000000e+00 : f32
    %13 = vector.broadcast %cst_11 : f32 to vector<8x64xf32>
    %14 = arith.maximumf %12, %13 : vector<8x64xf32>
    %c0_12 = arith.constant 0 : index
    %c0_13 = arith.constant 0 : index
    %15 = vector.load %arg7[%c0_12, %c0_13] : memref<64x32xf32, #tpu.memory_space<vmem>>, vector<64x32xf32>
    %cst_14 = arith.constant dense<0.000000e+00> : vector<8x32xf32>
    %16 = tpu.matmul %14, %15, %cst_14 {dimension_numbers = #tpu.dot_dimension_numbers<[1], [0], [0], [1], [0, 0, 1, 1], [], []>} : vector<8x64xf32>, vector<64x32xf32>, vector<8x32xf32> -> vector<8x32xf32>
    %c0_15 = arith.constant 0 : index
    %c0_16 = arith.constant 0 : index
    %17 = vector.load %arg8[%c0_15, %c0_16] : memref<1x32xf32, #tpu.memory_space<vmem>>, vector<1x32xf32>
    %18 = vector.broadcast %17 : vector<1x32xf32> to vector<8x32xf32>
    %19 = arith.addf %16, %18 : vector<8x32xf32>
    %cst_17 = arith.constant 0.000000e+00 : f32
    %20 = vector.broadcast %cst_17 : f32 to vector<8x32xf32>
    %21 = arith.maximumf %19, %20 : vector<8x32xf32>
    %c0_18 = arith.constant 0 : index
    %c0_19 = arith.constant 0 : index
    %22 = vector.load %arg10[%c0_18, %c0_19] : memref<4x4xf32, #tpu.memory_space<vmem>>, vector<1x4xf32>
    %c1 = arith.constant 1 : index
    %c0_20 = arith.constant 0 : index
    %23 = vector.load %arg10[%c1, %c0_20] : memref<4x4xf32, #tpu.memory_space<vmem>>, vector<1x4xf32>
    %c2 = arith.constant 2 : index
    %c0_21 = arith.constant 0 : index
    %24 = vector.load %arg10[%c2, %c0_21] : memref<4x4xf32, #tpu.memory_space<vmem>>, vector<1x4xf32>
    %c3 = arith.constant 3 : index
    %c0_22 = arith.constant 0 : index
    %25 = vector.load %arg10[%c3, %c0_22] : memref<4x4xf32, #tpu.memory_space<vmem>>, vector<1x4xf32>
    %c0_23 = arith.constant 0 : index
    %c0_24 = arith.constant 0 : index
    %26 = vector.load %arg9[%c0_23, %c0_24] : memref<32x4xf32, #tpu.memory_space<vmem>>, vector<32x4xf32>
    %cst_25 = arith.constant dense<0.000000e+00> : vector<8x4xf32>
    %27 = tpu.matmul %21, %26, %cst_25 {dimension_numbers = #tpu.dot_dimension_numbers<[1], [0], [0], [1], [0, 0, 1, 1], [], []>} : vector<8x32xf32>, vector<32x4xf32>, vector<8x4xf32> -> vector<8x4xf32>
    %28 = vector.broadcast %22 : vector<1x4xf32> to vector<8x4xf32>
    %29 = arith.addf %27, %28 : vector<8x4xf32>
    %30 = math.tanh %29 : vector<8x4xf32>
    %c0_26 = arith.constant 0 : index
    %c0_27 = arith.constant 0 : index
    %31 = vector.load %arg2[%c0_26, %c0_27] : memref<8x4xf32, #tpu.memory_space<vmem>>, vector<8x4xf32>
    %32 = vector.broadcast %23 : vector<1x4xf32> to vector<8x4xf32>
    %33 = arith.mulf %32, %31 : vector<8x4xf32>
    %34 = arith.addf %30, %33 : vector<8x4xf32>
    %35 = arith.subf %34, %30 : vector<8x4xf32>
    %36 = arith.mulf %35, %35 : vector<8x4xf32>
    %37 = vector.broadcast %24 : vector<1x4xf32> to vector<8x4xf32>
    %38 = arith.mulf %36, %37 : vector<8x4xf32>
    %39 = vector.broadcast %25 : vector<1x4xf32> to vector<8x4xf32>
    %40 = arith.subf %38, %39 : vector<8x4xf32>
    %41 = tpu.concatenate %34, %40 in 1 : vector<8x4xf32>, vector<8x4xf32> -> vector<8x8xf32>
    %c0_28 = arith.constant 0 : index
    %c0_29 = arith.constant 0 : index
    %42 = vector.load %arg11[%c0_28, %c0_29] : memref<8x8xf32, #tpu.memory_space<vmem>>, vector<8x8xf32>
    tpu.vector_store %arg11[%c0_28, %c0_29], %41 {strides = array<i32>} : memref<8x8xf32, #tpu.memory_space<vmem>>, vector<8x8xf32>,
    return
  }
  func.func @transform_0(%arg0: i32) -> (i32, i32) {
    %c0_i32 = arith.constant 0 : i32
    %c0_i32_0 = arith.constant 0 : i32
    return %arg0, %c0_i32 : i32, i32
  }
  func.func @transform_1(%arg0: i32) -> (i32, i32) {
    %c0_i32 = arith.constant 0 : i32
    %c0_i32_0 = arith.constant 0 : i32
    return %arg0, %c0_i32 : i32, i32
  }
  func.func @transform_2(%arg0: i32) -> (i32, i32) {
    %c0_i32 = arith.constant 0 : i32
    %c0_i32_0 = arith.constant 0 : i32
    %c0_i32_1 = arith.constant 0 : i32
    return %c0_i32, %c0_i32_0 : i32, i32
  }
  func.func @transform_3(%arg0: i32) -> (i32, i32) {
    %c0_i32 = arith.constant 0 : i32
    %c0_i32_0 = arith.constant 0 : i32
    %c0_i32_1 = arith.constant 0 : i32
    return %c0_i32, %c0_i32_0 : i32, i32
  }
  func.func @transform_4(%arg0: i32) -> (i32, i32) {
    %c0_i32 = arith.constant 0 : i32
    %c0_i32_0 = arith.constant 0 : i32
    %c0_i32_1 = arith.constant 0 : i32
    return %c0_i32, %c0_i32_0 : i32, i32
  }
  func.func @transform_5(%arg0: i32) -> (i32, i32) {
    %c0_i32 = arith.constant 0 : i32
    %c0_i32_0 = arith.constant 0 : i32
    %c0_i32_1 = arith.constant 0 : i32
    return %c0_i32, %c0_i32_0 : i32, i32
  }
  func.func @transform_6(%arg0: i32) -> (i32, i32) {
    %c0_i32 = arith.constant 0 : i32
    %c0_i32_0 = arith.constant 0 : i32
    %c0_i32_1 = arith.constant 0 : i32
    return %c0_i32, %c0_i32_0 : i32, i32
  }
  func.func @transform_7(%arg0: i32) -> (i32, i32) {
    %c0_i32 = arith.constant 0 : i32
    %c0_i32_0 = arith.constant 0 : i32
    %c0_i32_1 = arith.constant 0 : i32
    return %c0_i32, %c0_i32_0 : i32, i32
  }
  func.func @transform_8(%arg0: i32) -> (i32, i32) {
    %c0_i32 = arith.constant 0 : i32
    %c0_i32_0 = arith.constant 0 : i32
    %c0_i32_1 = arith.constant 0 : i32
    return %c0_i32, %c0_i32_0 : i32, i32
  }
  func.func @transform_9(%arg0: i32) -> (i32, i32) {
    %c0_i32 = arith.constant 0 : i32
    %c0_i32_0 = arith.constant 0 : i32
    %c0_i32_1 = arith.constant 0 : i32
    return %c0_i32, %c0_i32_0 : i32, i32
  }
  func.func @transform_10(%arg0: i32) -> (i32, i32) {
    %c0_i32 = arith.constant 0 : i32
    %c0_i32_0 = arith.constant 0 : i32
    return %arg0, %c0_i32 : i32, i32
  }
}

</mosaic_0001>

<llo_original>
// kernel: tpu_custom_call.1
$region0: #{tpu_custom_call.1}
  #allocation0 [shape = 'u32[]', space=smem, size = 0x4, offset = 0x4, fixed_abs, tag = 'smem constant byte address 0x4 - core index']
  #allocation1 [shape = 'u32[72,128]{1,0:T(1,128)}', space=vmem, size = 0x9000, scoped, tag = 'internal scratch']
  %s0 = inlined_call_operand.vmem [shape: f32[8,33], index: 0, kind: input, shape index: {}]
  %s1 = inlined_call_operand.vmem [shape: f32[8,4], index: 1, kind: input, shape index: {}]
  %s2 = inlined_call_operand.vmem [shape: f32[33,128], index: 2, kind: input, shape index: {}]
  %s3 = inlined_call_operand.vmem [shape: f32[1,128], index: 3, kind: input, shape index: {}]
  %s4 = inlined_call_operand.vmem [shape: f32[128,64], index: 4, kind: input, shape index: {}]
  %s5 = inlined_call_operand.vmem [shape: f32[1,64], index: 5, kind: input, shape index: {}]
  %s6 = inlined_call_operand.vmem [shape: f32[64,32], index: 6, kind: input, shape index: {}]
  %s7 = inlined_call_operand.vmem [shape: f32[1,32], index: 7, kind: input, shape index: {}]
  %s8 = inlined_call_operand.vmem [shape: f32[32,4], index: 8, kind: input, shape index: {}]
  %s9 = inlined_call_operand.vmem [shape: f32[4,4], index: 9, kind: input, shape index: {}]
  %s10 = inlined_call_operand.hbm [shape: f32[8,8], index: 10, kind: output, shape index: {}]
  %s11 = sld [smem:[#allocation0]]
  $region50: #{tpu_custom_call.1} parent=0
    _
  %s13 = ssub.s32 1, %s11
  %s14 = scalar_select 0, %s13, %s11
  $region1: #{tpu_custom_call.1} parent=0
    #allocation2 [shape = 'u8[4096]{0}', space=vmem, size = 0x1000, scoped, tag = 'output window, operand 0, single buffered']
    #allocation3 [shape = 's32[1]{0}', space=sflag, size = 0x4, scoped, tag = 'scoped memory for tpu_custom_call.1']
    %15 = vsyncpa [#allocation3], 0
    // Predicated region
    $region2: #{tpu_custom_call.1} parent=1 // pred_check
      _
    $region3: #{tpu_custom_call.1} parent=1 // pred_check_branch
      %17 = sbr.rel (0) target = $region5
    $region4: #{tpu_custom_call.1} parent=1 // pred_region
      _
    $region5: #{tpu_custom_call.1} parent=1 // pred_fallthru
      _
    // Predicated region
    $region6: #{tpu_custom_call.1} parent=1 // pred_check
      _
    $region7: #{tpu_custom_call.1} parent=1 // pred_check_branch
      %19 = sbr.rel (0) target = $region9
    $region8: #{tpu_custom_call.1} parent=1 // pred_region
      _
    $region9: #{tpu_custom_call.1} parent=1 // pred_fallthru
      _
    // Predicated region
    $region10: #{tpu_custom_call.1} parent=1 // pred_check
      _
    $region11: #{tpu_custom_call.1} parent=1 // pred_check_branch
      %21 = sbr.rel (0) target = $region13
    $region12: #{tpu_custom_call.1} parent=1 // pred_region
      _
    $region13: #{tpu_custom_call.1} parent=1 // pred_fallthru
      _
    // Predicated region
    $region14: #{tpu_custom_call.1} parent=1 // pred_check
      _
    $region15: #{tpu_custom_call.1} parent=1 // pred_check_branch
      %23 = sbr.rel (0) target = $region17
    $region16: #{tpu_custom_call.1} parent=1 // pred_region
      _
    $region17: #{tpu_custom_call.1} parent=1 // pred_fallthru
      _
    // Predicated region
    $region18: #{tpu_custom_call.1} parent=1 // pred_check
      _
    $region19: #{tpu_custom_call.1} parent=1 // pred_check_branch
      %25 = sbr.rel (0) target = $region21
    $region20: #{tpu_custom_call.1} parent=1 // pred_region
      _
    $region21: #{tpu_custom_call.1} parent=1 // pred_fallthru
      _
    // Predicated region
    $region22: #{tpu_custom_call.1} parent=1 // pred_check
      _
    $region23: #{tpu_custom_call.1} parent=1 // pred_check_branch
      %27 = sbr.rel (0) target = $region25
    $region24: #{tpu_custom_call.1} parent=1 // pred_region
      _
    $region25: #{tpu_custom_call.1} parent=1 // pred_fallthru
      _
    // Predicated region
    $region26: #{tpu_custom_call.1} parent=1 // pred_check
      _
    $region27: #{tpu_custom_call.1} parent=1 // pred_check_branch
      %29 = sbr.rel (0) target = $region29
    $region28: #{tpu_custom_call.1} parent=1 // pred_region
      _
    $region29: #{tpu_custom_call.1} parent=1 // pred_fallthru
      _
    // Predicated region
    $region30: #{tpu_custom_call.1} parent=1 // pred_check
      _
    $region31: #{tpu_custom_call.1} parent=1 // pred_check_branch
      %31 = sbr.rel (0) target = $region33
    $region32: #{tpu_custom_call.1} parent=1 // pred_region
      _
    $region33: #{tpu_custom_call.1} parent=1 // pred_fallthru
      _
    // Predicated region
    $region34: #{tpu_custom_call.1} parent=1 // pred_check
      _
    $region35: #{tpu_custom_call.1} parent=1 // pred_check_branch
      %33 = sbr.rel (0) target = $region37
    $region36: #{tpu_custom_call.1} parent=1 // pred_region
      _
    $region37: #{tpu_custom_call.1} parent=1 // pred_fallthru
      _
    // Predicated region
    $region38: #{tpu_custom_call.1} parent=1 // pred_check
      _
    $region39: #{tpu_custom_call.1} parent=1 // pred_check_branch
      %35 = sbr.rel (0) target = $region41
    $region40: #{tpu_custom_call.1} parent=1 // pred_region
      _
    $region41: #{tpu_custom_call.1} parent=1 // pred_fallthru
      _
    %v36 = vld [vmem:[%s0] sm:$0xff]
    %v37 = vld [vmem:[%s2] sm:$0xff]
    %v38 = vld [vmem:[%s2 + $0x8] sm:$0xff]
    %v39 = vld [vmem:[%s2 + $0x10] sm:$0xff]
    %v40 = vld [vmem:[%s2 + $0x18] sm:$0xff]
    %v41 = vld [vmem:[%s2 + $0x20] sm:$0x1]
    %v42 = vld [vmem:[%s3] sm:$0x1]
    %v44 = vperm.slane %v42, 0
    %vm46 = vcmask 269312
    %v48 = vsel %vm46, %v36, 0
    %vm50 = vcmask 1040384
    %v52 = vsel %vm50, %v41, 0
    %54 = vmatpush.msra.mxu0 0.0
    %55 = vmatpush.msra.mxu0 0.0
    %56 = vmatpush.msra.mxu0 0.0
    %57 = vmatpush.msra.mxu0 0.0
    %58 = vmatpush.msra.mxu0 0.0
    %59 = vmatpush.msra.mxu0 0.0
    %60 = vmatpush.msra.mxu0 0.0
    %61 = vmatpush.msra.mxu0 0.0
    %62 = vmatpush.msra.mxu0 0.0
    %63 = vmatpush.msra.mxu0 0.0
    %64 = vmatpush.msra.mxu0 0.0
    %65 = vmatpush.msra.mxu0 %v52
    %66 = vmatpush.msra.mxu0 %v40
    %67 = vmatpush.msra.mxu0 %v39
    %68 = vmatpush.msra.mxu0 %v38
    %69 = vmatpush.msra.mxu0 %v37
    %70 = vmatmul.f32.gmra.mxu0 %v48
    %v71 = vpop.f32.mrf.mxu0
    %v72 = vadd.f32 %v44, %v71
    %73 = vdwg.mxu0
    %v74 = vmax.f32 %v72, 0.0
    %v75 = vld [vmem:[%s4] sm:$0xff]
    %v76 = vld [vmem:[%s4 + $0x8] sm:$0xff]
    %v77 = vld [vmem:[%s4 + $0x10] sm:$0xff]
    %v78 = vld [vmem:[%s4 + $0x18] sm:$0xff]
    %v79 = vld [vmem:[%s4 + $0x20] sm:$0xff]
    %v80 = vld [vmem:[%s4 + $0x28] sm:$0xff]
    %v81 = vld [vmem:[%s4 + $0x30] sm:$0xff]
    %v82 = vld [vmem:[%s4 + $0x38] sm:$0xff]
    %v83 = vld [vmem:[%s4 + $0x40] sm:$0xff]
    %v84 = vld [vmem:[%s4 + $0x48] sm:$0xff]
    %v85 = vld [vmem:[%s4 + $0x50] sm:$0xff]
    %v86 = vld [vmem:[%s4 + $0x58] sm:$0xff]
    %v87 = vld [vmem:[%s4 + $0x60] sm:$0xff]
    %v88 = vld [vmem:[%s4 + $0x68] sm:$0xff]
    %v89 = vld [vmem:[%s4 + $0x70] sm:$0xff]
    %v90 = vld [vmem:[%s4 + $0x78] sm:$0xff]
    %v91 = vld [vmem:[%s5] sm:$0x1]
    %v93 = vperm.slane %v91, 0
    %95 = vmatpush.msra.mxu0 %v90
    %96 = vmatpush.msra.mxu0 %v89
    %97 = vmatpush.msra.mxu0 %v88
    %98 = vmatpush.msra.mxu0 %v87
    %99 = vmatpush.msra.mxu0 %v86
    %100 = vmatpush.msra.mxu0 %v85
    %101 = vmatpush.msra.mxu0 %v84
    %102 = vmatpush.msra.mxu0 %v83
    %103 = vmatpush.msra.mxu0 %v82
    %104 = vmatpush.msra.mxu0 %v81
    %105 = vmatpush.msra.mxu0 %v80
    %106 = vmatpush.msra.mxu0 %v79
    %107 = vmatpush.msra.mxu0 %v78
    %108 = vmatpush.msra.mxu0 %v77
    %109 = vmatpush.msra.mxu0 %v76
    %110 = vmatpush.msra.mxu0 %v75
    %111 = vmatmul.f32.gmra.mxu0 %v74
    %v112 = vpop.f32.mrf.mxu0
    %v113 = vadd.f32 %v93, %v112
    %114 = vdwg.mxu0
    %v115 = vmax.f32 %v113, 0.0
    %v116 = vld [vmem:[%s6] sm:$0xff]
    %v117 = vld [vmem:[%s6 + $0x8] sm:$0xff]
    %v118 = vld [vmem:[%s6 + $0x10] sm:$0xff]
    %v119 = vld [vmem:[%s6 + $0x18] sm:$0xff]
    %v120 = vld [vmem:[%s6 + $0x20] sm:$0xff]
    %v121 = vld [vmem:[%s6 + $0x28] sm:$0xff]
    %v122 = vld [vmem:[%s6 + $0x30] sm:$0xff]
    %v123 = vld [vmem:[%s6 + $0x38] sm:$0xff]
    %v124 = vld [vmem:[%s7] sm:$0x1]
    %v126 = vperm.slane %v124, 0
    %vm128 = vcmask 523264
    %v130 = vsel %vm128, %v115, 0
    %132 = vmatpush.msra.mxu0 0.0
    %133 = vmatpush.msra.mxu0 0.0
    %134 = vmatpush.msra.mxu0 0.0
    %135 = vmatpush.msra.mxu0 0.0
    %136 = vmatpush.msra.mxu0 0.0
    %137 = vmatpush.msra.mxu0 0.0
    %138 = vmatpush.msra.mxu0 0.0
    %139 = vmatpush.msra.mxu0 0.0
    %140 = vmatpush.msra.mxu0 %v123
    %141 = vmatpush.msra.mxu0 %v122
    %142 = vmatpush.msra.mxu0 %v121
    %143 = vmatpush.msra.mxu0 %v120
    %144 = vmatpush.msra.mxu0 %v119
    %145 = vmatpush.msra.mxu0 %v118
    %146 = vmatpush.msra.mxu0 %v117
    %147 = vmatpush.msra.mxu0 %v116
    %148 = vmatmul.f32.gmra.mxu0 %v130
    %v149 = vpop.f32.mrf.mxu0
    %v150 = vadd.f32 %v126, %v149
    %151 = vdwg.mxu0
    %v152 = vmax.f32 %v150, 0.0
    %v153 = vld [vmem:[%s9] sm:$0x1]
    %v154 = vld [vmem:[%s9 + $0x1] sm:$0x1]
    %v155 = vld [vmem:[%s9 + $0x2] sm:$0x1]
    %v156 = vld [vmem:[%s9 + $0x3] sm:$0x1]
    %v157 = vld [vmem:[%s8] sm:$0xff]
    %v158 = vld [vmem:[%s8 + $0x8] sm:$0xff]
    %v159 = vld [vmem:[%s8 + $0x10] sm:$0xff]
    %v160 = vld [vmem:[%s8 + $0x18] sm:$0xff]
    %v161 = vperm.slane %v153, 0
    %vm162 = vcmask 261120
    %v164 = vsel %vm162, %v152, 0
    %166 = vmatpush.msra.mxu0 0.0
    %167 = vmatpush.msra.mxu0 0.0
    %168 = vmatpush.msra.mxu0 0.0
    %169 = vmatpush.msra.mxu0 0.0
    %170 = vmatpush.msra.mxu0 0.0
    %171 = vmatpush.msra.mxu0 0.0
    %172 = vmatpush.msra.mxu0 0.0
    %173 = vmatpush.msra.mxu0 0.0
    %174 = vmatpush.msra.mxu0 0.0
    %175 = vmatpush.msra.mxu0 0.0
    %176 = vmatpush.msra.mxu0 0.0
    %177 = vmatpush.msra.mxu0 0.0
    %178 = vmatpush.msra.mxu0 %v160
    %179 = vmatpush.msra.mxu0 %v159
    %180 = vmatpush.msra.mxu0 %v158
    %181 = vmatpush.msra.mxu0 %v157
    %182 = vmatmul.f32.gmra.mxu0 %v164
    %v183 = vpop.f32.mrf.mxu0
    %v184 = vadd.f32 %v161, %v183
    %185 = vdwg.mxu0
    %v186 = vtanh.pop %v184
    %v187 = vld [vmem:[%s1] sm:$0xff]
    %v188 = vperm.slane %v154, 0
    %v189 = vmul.f32 %v188, %v187
    %v190 = vadd.f32 %v186, %v189
    %v191 = vsub.f32 %v190, %v186
    %v192 = vmul.f32 %v191, %v191
    %v193 = vperm.slane %v155, 0
    %v194 = vmul.f32 %v192, %v193
    %v195 = vperm.slane %v156, 0
    %v196 = vsub.f32 %v194, %v195
    %198 = vrot.lane.b32.xlu0 %v196, 4
    %v199 = vpop.permute.xlu0 %198
    %vm201 = vcmask 31744
    %v202 = vsel %vm201, %v190, %v199
    %vm203 = vcmask 64512
    %204 = vst.msk [vmem:[#allocation2] sm:$0xff] %vm203, %v202
    // Predicated region
    $region42: #{tpu_custom_call.1} parent=1 // pred_check
      _
    $region43: #{tpu_custom_call.1} parent=1 // pred_check_branch
      %206 = sbr.rel (0) target = $region45
    $region44: #{tpu_custom_call.1} parent=1 // pred_region
      %208 = vsyncadd [#allocation3], 0
      %s210 = sshll.u32 [#allocation2], 4
      %s211 = int_to_ptr.vmem [resolvable:$true] %s210
      %s212 = sshll.u32 %s10, 4
      %s213 = int_to_ptr.hbm [resolvable:$true] %s212
      %215 = dma.vmem_to_hbm [thread:$0]  %s211, 128, %s213, [#allocation3]
    $region45: #{tpu_custom_call.1} parent=1 // pred_fallthru
      _
    // Predicated region
    $region46: #{tpu_custom_call.1} parent=1 // pred_check
      _
    $region47: #{tpu_custom_call.1} parent=1 // pred_check_branch
      %217 = sbr.rel (0) target = $region49
    $region48: #{tpu_custom_call.1} parent=1 // pred_region
      %219 = dma.done [#allocation3], 128
    $region49: #{tpu_custom_call.1} parent=1 // pred_fallthru
      _
    %220 = vsyncpa [#allocation3], 1

</llo_original>
